<compile_context>
chip_gen: v6e
topology: v6e:2x2x1
jax: 0.10.0
libtpu: 0.0.40
codegen_flags: <defaults>
</compile_context>

<pallas_src>
import functools

import jax
import jax.numpy as jnp
from jax.experimental import pallas as pl
from jax.experimental.pallas import tpu as pltpu

D_IN = 32               # PreBeliefNN.out
D_HID = 10              # BeliefLSTM.hidden
D_CAT = D_IN + D_HID    # 42
K_PAD = 128             # contraction dim zero-padded to one full lane vreg
GATE_PAD = 128          # each gate gets its own 128-lane block
N_GATES = 4             # [f | i | o | g(candidate)]


def _round_up(x, m):
    return ((x + m - 1) // m) * m


def _belief_lstm_kernel(xh_ref, c_ref, w_ref, b_ref, out_ref):
    # xh_ref : [bb, 128]   lanes 0:32 = x, 32:42 = h_prev, rest 0
    # c_ref  : [bb, 128]   lanes 0:10 = c_prev, rest 0
    # w_ref  : [128, 512]  packed/padded gate weights
    # b_ref  : [1, 512]    packed/padded gate biases
    # out_ref: [bb, 256]   lanes 0:128 -> c, lanes 128:256 -> h
    gates = jnp.dot(xh_ref[...], w_ref[...],
                    preferred_element_type=jnp.float32) + b_ref[...]  # [bb, 512]

    # One sigmoid over the f/i/o blocks (128-lane aligned slices -> no rotates).
    fio = jax.nn.sigmoid(gates[:, 0:3 * GATE_PAD])
    f = fio[:, 0 * GATE_PAD:1 * GATE_PAD]
    i = fio[:, 1 * GATE_PAD:2 * GATE_PAD]
    o = fio[:, 2 * GATE_PAD:3 * GATE_PAD]
    g = jnp.tanh(gates[:, 3 * GATE_PAD:4 * GATE_PAD])

    c = f * c_ref[...] + i * g          # padded lanes: 0.5*0 + 0.5*0 = 0
    h = o * jnp.tanh(c)                 # padded lanes: 0.5*tanh(0) = 0

    # 128-aligned, lane-dense stores (no masked vst.msk).
    out_ref[:, 0:GATE_PAD] = c.astype(out_ref.dtype)
    out_ref[:, GATE_PAD:2 * GATE_PAD] = h.astype(out_ref.dtype)


@functools.partial(jax.jit, static_argnames=("block_b",))
def belief_lstm(c_prev, h_prev, x, w_pad, b_pad, *, block_b=512):
    """One BeliefLSTM cell update.  Returns (c, h), each [B, D_HID]."""
    B = x.shape[0]
    bb = min(block_b, _round_up(B, 8))      # rows per grid step (multiple of 8)
    B_pad = _round_up(B, bb)

    # Lane-dense packed activation [x | h | 0] and padded cell state.
    xh = jnp.concatenate([x, h_prev], axis=-1)                          # [B, 42]
    xh_pad = jnp.zeros((B_pad, K_PAD), jnp.float32).at[:B, :D_CAT].set(xh)
    c_pad = jnp.zeros((B_pad, GATE_PAD), jnp.float32).at[:B, :D_HID].set(c_prev)

    out = pl.pallas_call(
        _belief_lstm_kernel,
        out_shape=jax.ShapeDtypeStruct((B_pad, 2 * GATE_PAD), jnp.float32),
        grid=(B_pad // bb,),
        in_specs=[
            pl.BlockSpec((bb, K_PAD), lambda i: (i, 0)),                 # xh
            pl.BlockSpec((bb, GATE_PAD), lambda i: (i, 0)),              # c_prev
            pl.BlockSpec((K_PAD, N_GATES * GATE_PAD), lambda i: (0, 0)),  # W (resident)
            pl.BlockSpec((1, N_GATES * GATE_PAD), lambda i: (0, 0)),      # b (resident)
        ],
        out_specs=pl.BlockSpec((bb, 2 * GATE_PAD), lambda i: (i, 0)),
        compiler_params=pltpu.CompilerParams(
            dimension_semantics=("parallel",)),   # v7x: shard batch over 2 TCs
    )(xh_pad, c_pad, w_pad, b_pad)

    c_out = out[:B, 0:D_HID]
    h_out = out[:B, GATE_PAD:GATE_PAD + D_HID]
    return c_out, h_out


def _make_params(key):
    """Deterministic init of the four Linear(42 -> 10) layers, packed/padded.

    Gate gi occupies rows 0:42 and lanes [gi*128, gi*128+10) of w_pad; all
    padding is zero, so the padded matmul is mathematically identical to the
    four separate Linear layers.
    """
    keys = jax.random.split(key, 2 * N_GATES)
    bound = 1.0 / jnp.sqrt(D_CAT)           # torch.nn.Linear default init scale
    w_raw, b_raw = [], []
    for gi in range(N_GATES):                # order: f, i, o, g(candidate)
        w = jax.random.uniform(keys[2 * gi], (D_CAT, D_HID),
                               minval=-bound, maxval=bound, dtype=jnp.float32)
        bb = jax.random.uniform(keys[2 * gi + 1], (D_HID,),
                                minval=-bound, maxval=bound, dtype=jnp.float32)
        w_raw.append(w)
        b_raw.append(bb)

    w_pad = jnp.zeros((K_PAD, N_GATES * GATE_PAD), jnp.float32)
    b_pad = jnp.zeros((1, N_GATES * GATE_PAD), jnp.float32)
    for gi in range(N_GATES):
        w_pad = w_pad.at[:D_CAT, gi * GATE_PAD:gi * GATE_PAD + D_HID].set(w_raw[gi])
        b_pad = b_pad.at[0, gi * GATE_PAD:gi * GATE_PAD + D_HID].set(b_raw[gi])
    return w_pad, b_pad, w_raw, b_raw


def _reference(c_prev, h_prev, x, w_raw, b_raw):
    """Plain-JAX mirror of BeliefLSTM.forward (built from the raw params)."""
    xh = jnp.concatenate([x, h_prev], axis=-1)
    f = jax.nn.sigmoid(xh @ w_raw[0] + b_raw[0])
    i = jax.nn.sigmoid(xh @ w_raw[1] + b_raw[1])
    o = jax.nn.sigmoid(xh @ w_raw[2] + b_raw[2])
    g = jnp.tanh(xh @ w_raw[3] + b_raw[3])
    c = f * c_prev + i * g
    h = o * jnp.tanh(c)
    return c, h


if __name__ == "__main__":
    key = jax.random.PRNGKey(0)
    k_in, k_par = jax.random.split(key)
    k_x, k_h, k_c = jax.random.split(k_in, 3)

    w_pad, b_pad, w_raw, b_raw = _make_params(k_par)

    # --- main small-shape test (B=2, single grid step) -----------------------
    B = 2
    x = jax.random.normal(k_x, (B, D_IN), dtype=jnp.float32)
    h_prev = jax.random.normal(k_h, (B, D_HID), dtype=jnp.float32)
    c_prev = jax.random.normal(k_c, (B, D_HID), dtype=jnp.float32)

    c_out, h_out = belief_lstm(c_prev, h_prev, x, w_pad, b_pad)
    jax.block_until_ready((c_out, h_out))

    c_ref, h_ref = _reference(c_prev, h_prev, x, w_raw, b_raw)
    assert c_out.shape == (B, D_HID) and h_out.shape == (B, D_HID)
    assert jnp.allclose(c_out, c_ref, atol=1e-5), "cell state mismatch"
    assert jnp.allclose(h_out, h_ref, atol=1e-5), "hidden state mismatch"

    # --- secondary check: multi-block grid path (B=24, block_b=8 -> grid=3) --
    B2 = 24
    x2 = jax.random.normal(jax.random.PRNGKey(1), (B2, D_IN), dtype=jnp.float32)
    h2 = jax.random.normal(jax.random.PRNGKey(2), (B2, D_HID), dtype=jnp.float32)
    c2 = jax.random.normal(jax.random.PRNGKey(3), (B2, D_HID), dtype=jnp.float32)
    c2_out, h2_out = belief_lstm(c2, h2, x2, w_pad, b_pad, block_b=8)
    jax.block_until_ready((c2_out, h2_out))
    c2_ref, h2_ref = _reference(c2, h2, x2, w_raw, b_raw)
    assert jnp.allclose(c2_out, c2_ref, atol=1e-5), "cell state mismatch (tiled)"
    assert jnp.allclose(h2_out, h2_ref, atol=1e-5), "hidden state mismatch (tiled)"

    print("KERNEL_OK")
</pallas_src>

<mosaic_0001>
module attributes {stable_mosaic.version = 11 : i64} {
  func.func @_belief_lstm_kernel(%arg0: i32, %arg1: memref<8x128xf32, #tpu.memory_space<vmem>>, %arg2: memref<8x128xf32, #tpu.memory_space<vmem>>, %arg3: memref<128x512xf32, #tpu.memory_space<vmem>>, %arg4: memref<1x512xf32, #tpu.memory_space<vmem>>, %arg5: memref<8x256xf32, #tpu.memory_space<vmem>>) attributes {dimension_semantics = [#tpu.dimension_semantics<parallel>], iteration_bounds = array<i64: 1>, scalar_prefetch = 0 : i64, scratch_operands = 0 : i64, tpu.core_type = #tpu.core_type<tc>, window_params = [{transform_indices = @transform_0, window_bounds = array<i64: 8, 128>}, {transform_indices = @transform_1, window_bounds = array<i64: 8, 128>}, {pipeline_mode = #tpu.pipeline_mode<synchronous>, transform_indices = @transform_2, window_bounds = array<i64: 128, 512>}, {pipeline_mode = #tpu.pipeline_mode<synchronous>, transform_indices = @transform_3, window_bounds = array<i64: 1, 512>}, {transform_indices = @transform_4, window_bounds = array<i64: 8, 256>}]} {
    %c0 = arith.constant 0 : index
    %c0_0 = arith.constant 0 : index
    %0 = vector.load %arg1[%c0, %c0_0] : memref<8x128xf32, #tpu.memory_space<vmem>>, vector<8x128xf32>
    %c0_1 = arith.constant 0 : index
    %c0_2 = arith.constant 0 : index
    %1 = vector.load %arg3[%c0_1, %c0_2] : memref<128x512xf32, #tpu.memory_space<vmem>>, vector<128x512xf32>
    %cst = arith.constant dense<0.000000e+00> : vector<8x512xf32>
    %2 = tpu.matmul %0, %1, %cst {dimension_numbers = #tpu.dot_dimension_numbers<[1], [0], [0], [1], [0, 0, 1, 1], [], []>} : vector<8x128xf32>, vector<128x512xf32>, vector<8x512xf32> -> vector<8x512xf32>
    %c0_3 = arith.constant 0 : index
    %c0_4 = arith.constant 0 : index
    %3 = vector.load %arg4[%c0_3, %c0_4] : memref<1x512xf32, #tpu.memory_space<vmem>>, vector<1x512xf32>
    %4 = vector.broadcast %3 : vector<1x512xf32> to vector<8x512xf32>
    %5 = arith.addf %2, %4 : vector<8x512xf32>
    %6 = vector.extract_strided_slice %5 {offsets = [0, 0], sizes = [8, 384], strides = [1, 1]} : vector<8x512xf32> to vector<8x384xf32>
    %7 = arith.negf %6 : vector<8x384xf32>
    %8 = math.exp %7 : vector<8x384xf32>
    %cst_5 = arith.constant 1.000000e+00 : f32
    %9 = vector.broadcast %cst_5 : f32 to vector<8x384xf32>
    %10 = arith.addf %9, %8 : vector<8x384xf32>
    %11 = arith.divf %9, %10 : vector<8x384xf32>
    %12 = vector.extract_strided_slice %11 {offsets = [0, 0], sizes = [8, 128], strides = [1, 1]} : vector<8x384xf32> to vector<8x128xf32>
    %13 = vector.extract_strided_slice %11 {offsets = [0, 128], sizes = [8, 128], strides = [1, 1]} : vector<8x384xf32> to vector<8x128xf32>
    %14 = vector.extract_strided_slice %11 {offsets = [0, 256], sizes = [8, 128], strides = [1, 1]} : vector<8x384xf32> to vector<8x128xf32>
    %15 = vector.extract_strided_slice %5 {offsets = [0, 384], sizes = [8, 128], strides = [1, 1]} : vector<8x512xf32> to vector<8x128xf32>
    %16 = math.tanh %15 : vector<8x128xf32>
    %c0_6 = arith.constant 0 : index
    %c0_7 = arith.constant 0 : index
    %17 = vector.load %arg2[%c0_6, %c0_7] : memref<8x128xf32, #tpu.memory_space<vmem>>, vector<8x128xf32>
    %18 = arith.mulf %12, %17 : vector<8x128xf32>
    %19 = arith.mulf %13, %16 : vector<8x128xf32>
    %20 = arith.addf %18, %19 : vector<8x128xf32>
    %21 = math.tanh %20 : vector<8x128xf32>
    %22 = arith.mulf %14, %21 : vector<8x128xf32>
    %c0_8 = arith.constant 0 : index
    %c0_9 = arith.constant 0 : index
    %23 = vector.load %arg5[%c0_8, %c0_9] : memref<8x256xf32, #tpu.memory_space<vmem>>, vector<8x128xf32>
    tpu.vector_store %arg5[%c0_8, %c0_9], %20 {strides = array<i32>} : memref<8x256xf32, #tpu.memory_space<vmem>>, vector<8x128xf32>,
    %c0_10 = arith.constant 0 : index
    %c128 = arith.constant 128 : index
    %24 = vector.load %arg5[%c0_10, %c128] : memref<8x256xf32, #tpu.memory_space<vmem>>, vector<8x128xf32>
    tpu.vector_store %arg5[%c0_10, %c128], %22 {strides = array<i32>} : memref<8x256xf32, #tpu.memory_space<vmem>>, vector<8x128xf32>,
    return
  }
  func.func @transform_0(%arg0: i32) -> (i32, i32) {
    %c0_i32 = arith.constant 0 : i32
    %c0_i32_0 = arith.constant 0 : i32
    return %arg0, %c0_i32 : i32, i32
  }
  func.func @transform_1(%arg0: i32) -> (i32, i32) {
    %c0_i32 = arith.constant 0 : i32
    %c0_i32_0 = arith.constant 0 : i32
    return %arg0, %c0_i32 : i32, i32
  }
  func.func @transform_2(%arg0: i32) -> (i32, i32) {
    %c0_i32 = arith.constant 0 : i32
    %c0_i32_0 = arith.constant 0 : i32
    %c0_i32_1 = arith.constant 0 : i32
    return %c0_i32, %c0_i32_0 : i32, i32
  }
  func.func @transform_3(%arg0: i32) -> (i32, i32) {
    %c0_i32 = arith.constant 0 : i32
    %c0_i32_0 = arith.constant 0 : i32
    %c0_i32_1 = arith.constant 0 : i32
    return %c0_i32, %c0_i32_0 : i32, i32
  }
  func.func @transform_4(%arg0: i32) -> (i32, i32) {
    %c0_i32 = arith.constant 0 : i32
    %c0_i32_0 = arith.constant 0 : i32
    return %arg0, %c0_i32 : i32, i32
  }
}

</mosaic_0001>

<llo_original>
// kernel: belief_lstm.1
$region0: #{belief_lstm.1}
  #allocation0 [shape = 'u32[]', space=smem, size = 0x4, offset = 0x4, fixed_abs, tag = 'smem constant byte address 0x4 - core index']
  #allocation1 [shape = 'u32[144,128]{1,0:T(1,128)}', space=vmem, size = 0x12000, scoped, tag = 'internal scratch']
  %s0 = inlined_call_operand.vmem [shape: f32[8,128], index: 0, kind: input, shape index: {}]
  %s1 = inlined_call_operand.vmem [shape: f32[8,128], index: 1, kind: input, shape index: {}]
  %s2 = inlined_call_operand.hbm [shape: f32[128,512], index: 2, kind: input, shape index: {}]
  %s3 = inlined_call_operand.vmem [shape: f32[1,512], index: 3, kind: input, shape index: {}]
  %s4 = inlined_call_operand.vmem [shape: f32[8,256], index: 4, kind: output, shape index: {}]
  %s5 = sld [smem:[#allocation0]]
  $region30: #{belief_lstm.1} parent=0
    _
  %s7 = ssub.s32 1, %s5
  %s8 = scalar_select 0, %s7, %s5
  $region1: #{belief_lstm.1} parent=0
    #allocation2 [shape = 'u8[262144]{0}', space=vmem, size = 0x40000, scoped, tag = 'input window, operand 2, single buffered']
    #allocation3 [shape = 's32[1]{0}', space=sflag, size = 0x4, scoped, tag = 'scoped memory for belief_lstm.1']
    %9 = vsyncpa [#allocation3], 0
    // Predicated region
    $region2: #{belief_lstm.1} parent=1 // pred_check
      _
    $region3: #{belief_lstm.1} parent=1 // pred_check_branch
      %11 = sbr.rel (0) target = $region5
    $region4: #{belief_lstm.1} parent=1 // pred_region
      _
    $region5: #{belief_lstm.1} parent=1 // pred_fallthru
      _
    // Predicated region
    $region6: #{belief_lstm.1} parent=1 // pred_check
      _
    $region7: #{belief_lstm.1} parent=1 // pred_check_branch
      %13 = sbr.rel (0) target = $region9
    $region8: #{belief_lstm.1} parent=1 // pred_region
      _
    $region9: #{belief_lstm.1} parent=1 // pred_fallthru
      _
    // Predicated region
    $region10: #{belief_lstm.1} parent=1 // pred_check
      _
    $region11: #{belief_lstm.1} parent=1 // pred_check_branch
      %15 = sbr.rel (0) target = $region13
    $region12: #{belief_lstm.1} parent=1 // pred_region
      %s17 = ssub.s32 8192, 8192
      %18 = vsyncadd [#allocation3], %s17
      %s19 = sshll.u32 [#allocation2], 4
      %s20 = int_to_ptr.vmem [resolvable:$true] %s19
      %25 = dma.hbm_to_vmem [thread:$0]  %s2, 8192, %s20, [#allocation3], 512, 512, 32
    $region13: #{belief_lstm.1} parent=1 // pred_fallthru
      _
    // Predicated region
    $region14: #{belief_lstm.1} parent=1 // pred_check
      _
    $region15: #{belief_lstm.1} parent=1 // pred_check_branch
      %27 = sbr.rel (0) target = $region17
    $region16: #{belief_lstm.1} parent=1 // pred_region
      _
    $region17: #{belief_lstm.1} parent=1 // pred_fallthru
      _
    // Predicated region
    $region18: #{belief_lstm.1} parent=1 // pred_check
      _
    $region19: #{belief_lstm.1} parent=1 // pred_check_branch
      %29 = sbr.rel (0) target = $region21
    $region20: #{belief_lstm.1} parent=1 // pred_region
      %30 = dma.done [#allocation3], 8192
    $region21: #{belief_lstm.1} parent=1 // pred_fallthru
      _
    %v31 = vld [vmem:[%s0] sm:$0xff]
    %v32 = vld [vmem:[#allocation2] sm:$0xff]
    %v33 = vld [vmem:[#allocation2 + $0x8] sm:$0xff]
    %v34 = vld [vmem:[#allocation2 + $0x10] sm:$0xff]
    %v35 = vld [vmem:[#allocation2 + $0x18] sm:$0xff]
    %v36 = vld [vmem:[#allocation2 + $0x20] sm:$0xff]
    %v37 = vld [vmem:[#allocation2 + $0x28] sm:$0xff]
    %v38 = vld [vmem:[#allocation2 + $0x30] sm:$0xff]
    %v39 = vld [vmem:[#allocation2 + $0x38] sm:$0xff]
    %v40 = vld [vmem:[#allocation2 + $0x40] sm:$0xff]
    %v41 = vld [vmem:[#allocation2 + $0x48] sm:$0xff]
    %v42 = vld [vmem:[#allocation2 + $0x50] sm:$0xff]
    %v43 = vld [vmem:[#allocation2 + $0x58] sm:$0xff]
    %v44 = vld [vmem:[#allocation2 + $0x60] sm:$0xff]
    %v45 = vld [vmem:[#allocation2 + $0x68] sm:$0xff]
    %v46 = vld [vmem:[#allocation2 + $0x70] sm:$0xff]
    %v47 = vld [vmem:[#allocation2 + $0x78] sm:$0xff]
    %v48 = vld [vmem:[#allocation2 + $0x80] sm:$0xff]
    %v49 = vld [vmem:[#allocation2 + $0x88] sm:$0xff]
    %v50 = vld [vmem:[#allocation2 + $0x90] sm:$0xff]
    %v51 = vld [vmem:[#allocation2 + $0x98] sm:$0xff]
    %v52 = vld [vmem:[#allocation2 + $0xa0] sm:$0xff]
    %v53 = vld [vmem:[#allocation2 + $0xa8] sm:$0xff]
    %v54 = vld [vmem:[#allocation2 + $0xb0] sm:$0xff]
    %v55 = vld [vmem:[#allocation2 + $0xb8] sm:$0xff]
    %v56 = vld [vmem:[#allocation2 + $0xc0] sm:$0xff]
    %v57 = vld [vmem:[#allocation2 + $0xc8] sm:$0xff]
    %v58 = vld [vmem:[#allocation2 + $0xd0] sm:$0xff]
    %v59 = vld [vmem:[#allocation2 + $0xd8] sm:$0xff]
    %v60 = vld [vmem:[#allocation2 + $0xe0] sm:$0xff]
    %v61 = vld [vmem:[#allocation2 + $0xe8] sm:$0xff]
    %v62 = vld [vmem:[#allocation2 + $0xf0] sm:$0xff]
    %v63 = vld [vmem:[#allocation2 + $0xf8] sm:$0xff]
    %v64 = vld [vmem:[#allocation2 + $0x100] sm:$0xff]
    %v65 = vld [vmem:[#allocation2 + $0x108] sm:$0xff]
    %v66 = vld [vmem:[#allocation2 + $0x110] sm:$0xff]
    %v67 = vld [vmem:[#allocation2 + $0x118] sm:$0xff]
    %v68 = vld [vmem:[#allocation2 + $0x120] sm:$0xff]
    %v69 = vld [vmem:[#allocation2 + $0x128] sm:$0xff]
    %v70 = vld [vmem:[#allocation2 + $0x130] sm:$0xff]
    %v71 = vld [vmem:[#allocation2 + $0x138] sm:$0xff]
    %v72 = vld [vmem:[#allocation2 + $0x140] sm:$0xff]
    %v73 = vld [vmem:[#allocation2 + $0x148] sm:$0xff]
    %v74 = vld [vmem:[#allocation2 + $0x150] sm:$0xff]
    %v75 = vld [vmem:[#allocation2 + $0x158] sm:$0xff]
    %v76 = vld [vmem:[#allocation2 + $0x160] sm:$0xff]
    %v77 = vld [vmem:[#allocation2 + $0x168] sm:$0xff]
    %v78 = vld [vmem:[#allocation2 + $0x170] sm:$0xff]
    %v79 = vld [vmem:[#allocation2 + $0x178] sm:$0xff]
    %v80 = vld [vmem:[#allocation2 + $0x180] sm:$0xff]
    %v81 = vld [vmem:[#allocation2 + $0x188] sm:$0xff]
    %v82 = vld [vmem:[#allocation2 + $0x190] sm:$0xff]
    %v83 = vld [vmem:[#allocation2 + $0x198] sm:$0xff]
    %v84 = vld [vmem:[#allocation2 + $0x1a0] sm:$0xff]
    %v85 = vld [vmem:[#allocation2 + $0x1a8] sm:$0xff]
    %v86 = vld [vmem:[#allocation2 + $0x1b0] sm:$0xff]
    %v87 = vld [vmem:[#allocation2 + $0x1b8] sm:$0xff]
    %v88 = vld [vmem:[#allocation2 + $0x1c0] sm:$0xff]
    %v89 = vld [vmem:[#allocation2 + $0x1c8] sm:$0xff]
    %v90 = vld [vmem:[#allocation2 + $0x1d0] sm:$0xff]
    %v91 = vld [vmem:[#allocation2 + $0x1d8] sm:$0xff]
    %v92 = vld [vmem:[#allocation2 + $0x1e0] sm:$0xff]
    %v93 = vld [vmem:[#allocation2 + $0x1e8] sm:$0xff]
    %v94 = vld [vmem:[#allocation2 + $0x1f0] sm:$0xff]
    %v95 = vld [vmem:[#allocation2 + $0x1f8] sm:$0xff]
    %v96 = vld [vmem:[%s3] sm:$0xf]
    %v98 = vlaneseq
    %v99 = vshrl.u32 %v98, 7
    %v100 = vsub.s32 0, %v99
    %v101 = vrot.slane %v96, %v100
    %v102 = vlaneseq
    %v103 = vshrl.u32 %v102, 7
    %v104 = vsub.s32 1, %v103
    %v105 = vrot.slane %v96, %v104
    %v106 = vlaneseq
    %v107 = vshrl.u32 %v106, 7
    %v108 = vsub.s32 2, %v107
    %v109 = vrot.slane %v96, %v108
    %v110 = vlaneseq
    %v111 = vshrl.u32 %v110, 7
    %v112 = vsub.s32 3, %v111
    %v113 = vrot.slane %v96, %v112
    %118 = vmatprep.subr.mxu0 %v93
    %119 = vmatpush1.msra.mxu0 %v92
    %120 = vmatprep.subr.mxu0 %v89
    %121 = vmatpush1.msra.mxu0 %v88
    %122 = vmatprep.subr.mxu0 %v85
    %123 = vmatpush1.msra.mxu0 %v84
    %124 = vmatprep.subr.mxu0 %v81
    %125 = vmatpush1.msra.mxu0 %v80
    %126 = vmatprep.subr.mxu0 %v77
    %127 = vmatpush1.msra.mxu0 %v76
    %128 = vmatprep.subr.mxu0 %v73
    %129 = vmatpush1.msra.mxu0 %v72
    %130 = vmatprep.subr.mxu0 %v69
    %131 = vmatpush1.msra.mxu0 %v68
    %132 = vmatprep.subr.mxu0 %v65
    %133 = vmatpush1.msra.mxu0 %v64
    %134 = vmatprep.subr.mxu0 %v61
    %135 = vmatpush1.msra.mxu0 %v60
    %136 = vmatprep.subr.mxu0 %v57
    %137 = vmatpush1.msra.mxu0 %v56
    %138 = vmatprep.subr.mxu0 %v53
    %139 = vmatpush1.msra.mxu0 %v52
    %140 = vmatprep.subr.mxu0 %v49
    %141 = vmatpush1.msra.mxu0 %v48
    %142 = vmatprep.subr.mxu0 %v45
    %143 = vmatpush1.msra.mxu0 %v44
    %144 = vmatprep.subr.mxu0 %v41
    %145 = vmatpush1.msra.mxu0 %v40
    %146 = vmatprep.subr.mxu0 %v37
    %147 = vmatpush1.msra.mxu0 %v36
    %148 = vmatprep.subr.mxu0 %v33
    %149 = vmatpush1.msra.mxu0 %v32
    %150 = vmatprep.subr.mxu0 0.0
    %151 = vmatpush2.msra.mxu0 0.0
    %152 = vmatprep.subr.mxu0 0.0
    %153 = vmatpush2.msra.mxu0 0.0
    %154 = vmatprep.subr.mxu0 0.0
    %155 = vmatpush2.msra.mxu0 0.0
    %156 = vmatprep.subr.mxu0 0.0
    %157 = vmatpush2.msra.mxu0 0.0
    %158 = vmatprep.subr.mxu0 0.0
    %159 = vmatpush2.msra.mxu0 0.0
    %160 = vmatprep.subr.mxu0 0.0
    %161 = vmatpush2.msra.mxu0 0.0
    %162 = vmatprep.subr.mxu0 0.0
    %163 = vmatpush2.msra.mxu0 0.0
    %164 = vmatprep.subr.mxu0 0.0
    %165 = vmatpush2.msra.mxu0 0.0
    %166 = vmatprep.subr.mxu0 0.0
    %167 = vmatpush2.msra.mxu0 0.0
    %168 = vmatprep.subr.mxu0 0.0
    %169 = vmatpush2.msra.mxu0 0.0
    %170 = vmatprep.subr.mxu0 0.0
    %171 = vmatpush2.msra.mxu0 0.0
    %172 = vmatprep.subr.mxu0 0.0
    %173 = vmatpush2.msra.mxu0 0.0
    %174 = vmatprep.subr.mxu0 0.0
    %175 = vmatpush2.msra.mxu0 0.0
    %176 = vmatprep.subr.mxu0 0.0
    %177 = vmatpush2.msra.mxu0 0.0
    %178 = vmatprep.subr.mxu0 0.0
    %179 = vmatpush2.msra.mxu0 0.0
    %180 = vmatprep.subr.mxu0 0.0
    %181 = vmatpush2.msra.mxu0 0.0
    %182 = vmatprep.mubr.f32.mxu0 0.0
    %183 = vmatmul.mubr.f32.gmra.mxu0 %v31
    %v184 = vpop.f32.mrf.mxu0
    %v185 = vadd.f32 %v101, %v184
    %v186 = vpop.f32.mrf.mxu0
    %v187 = vadd.f32 %v105, %v186
    %188 = vdwg.mxu0
    %189 = vmatprep.subr.mxu0 %v95
    %190 = vmatpush1.msra.mxu0 %v94
    %191 = vmatprep.subr.mxu0 %v91
    %192 = vmatpush1.msra.mxu0 %v90
    %193 = vmatprep.subr.mxu0 %v87
    %194 = vmatpush1.msra.mxu0 %v86
    %195 = vmatprep.subr.mxu0 %v83
    %196 = vmatpush1.msra.mxu0 %v82
    %197 = vmatprep.subr.mxu0 %v79
    %198 = vmatpush1.msra.mxu0 %v78
    %199 = vmatprep.subr.mxu0 %v75
    %200 = vmatpush1.msra.mxu0 %v74
    %201 = vmatprep.subr.mxu0 %v71
    %202 = vmatpush1.msra.mxu0 %v70
    %203 = vmatprep.subr.mxu0 %v67
    %204 = vmatpush1.msra.mxu0 %v66
    %205 = vmatprep.subr.mxu0 %v63
    %206 = vmatpush1.msra.mxu0 %v62
    %207 = vmatprep.subr.mxu0 %v59
    %208 = vmatpush1.msra.mxu0 %v58
    %209 = vmatprep.subr.mxu0 %v55
    %210 = vmatpush1.msra.mxu0 %v54
    %211 = vmatprep.subr.mxu0 %v51
    %212 = vmatpush1.msra.mxu0 %v50
    %213 = vmatprep.subr.mxu0 %v47
    %214 = vmatpush1.msra.mxu0 %v46
    %215 = vmatprep.subr.mxu0 %v43
    %216 = vmatpush1.msra.mxu0 %v42
    %217 = vmatprep.subr.mxu0 %v39
    %218 = vmatpush1.msra.mxu0 %v38
    %219 = vmatprep.subr.mxu0 %v35
    %220 = vmatpush1.msra.mxu0 %v34
    %221 = vmatprep.subr.mxu0 0.0
    %222 = vmatpush2.msra.mxu0 0.0
    %223 = vmatprep.subr.mxu0 0.0
    %224 = vmatpush2.msra.mxu0 0.0
    %225 = vmatprep.subr.mxu0 0.0
    %226 = vmatpush2.msra.mxu0 0.0
    %227 = vmatprep.subr.mxu0 0.0
    %228 = vmatpush2.msra.mxu0 0.0
    %229 = vmatprep.subr.mxu0 0.0
    %230 = vmatpush2.msra.mxu0 0.0
    %231 = vmatprep.subr.mxu0 0.0
    %232 = vmatpush2.msra.mxu0 0.0
    %233 = vmatprep.subr.mxu0 0.0
    %234 = vmatpush2.msra.mxu0 0.0
    %235 = vmatprep.subr.mxu0 0.0
    %236 = vmatpush2.msra.mxu0 0.0
    %237 = vmatprep.subr.mxu0 0.0
    %238 = vmatpush2.msra.mxu0 0.0
    %239 = vmatprep.subr.mxu0 0.0
    %240 = vmatpush2.msra.mxu0 0.0
    %241 = vmatprep.subr.mxu0 0.0
    %242 = vmatpush2.msra.mxu0 0.0
    %243 = vmatprep.subr.mxu0 0.0
    %244 = vmatpush2.msra.mxu0 0.0
    %245 = vmatprep.subr.mxu0 0.0
    %246 = vmatpush2.msra.mxu0 0.0
    %247 = vmatprep.subr.mxu0 0.0
    %248 = vmatpush2.msra.mxu0 0.0
    %249 = vmatprep.subr.mxu0 0.0
    %250 = vmatpush2.msra.mxu0 0.0
    %251 = vmatprep.subr.mxu0 0.0
    %252 = vmatpush2.msra.mxu0 0.0
    %253 = vmatprep.mubr.f32.mxu0 0.0
    %254 = vmatmul.mubr.f32.gmra.mxu0 %v31
    %v255 = vpop.f32.mrf.mxu0
    %v256 = vadd.f32 %v109, %v255
    %v257 = vpop.f32.mrf.mxu0
    %v258 = vadd.f32 %v113, %v257
    %259 = vdwg.mxu0
    %v260 = vxor.u32 %v185, 2147483648
    %v261 = vxor.u32 %v187, 2147483648
    %v262 = vxor.u32 %v256, 2147483648
    %v263 = vmul.f32 %v260, 1.442695
    %v264 = vpow.pop %v263
    %v265 = vmul.f32 %v261, 1.442695
    %v266 = vpow.pop %v265
    %v267 = vmul.f32 %v262, 1.442695
    %v268 = vpow.pop %v267
    %v269 = vadd.f32 %v264, 1.0
    %v270 = vadd.f32 %v266, 1.0
    %v271 = vadd.f32 %v268, 1.0
    %v272 = vrcp.pop %v269
    %v273 = vmul.f32 1.0, %v272
    %v274 = vrcp.pop %v270
    %v275 = vmul.f32 1.0, %v274
    %v276 = vrcp.pop %v271
    %v277 = vmul.f32 1.0, %v276
    %v278 = vtanh.pop %v258
    %v279 = vld [vmem:[%s1] sm:$0xff]
    %v280 = vmul.f32 %v273, %v279
    %v281 = vmul.f32 %v275, %v278
    %v282 = vadd.f32 %v280, %v281
    %v283 = vtanh.pop %v282
    %v284 = vmul.f32 %v277, %v283
    %285 = vst [vmem:[%s4] sm:$0xff] %v282
    %286 = vst [vmem:[%s4 + $0x8] sm:$0xff] %v284
    // Predicated region
    $region22: #{belief_lstm.1} parent=1 // pred_check
      _
    $region23: #{belief_lstm.1} parent=1 // pred_check_branch
      %288 = sbr.rel (0) target = $region25
    $region24: #{belief_lstm.1} parent=1 // pred_region
      _
    $region25: #{belief_lstm.1} parent=1 // pred_fallthru
      _
    // Predicated region
    $region26: #{belief_lstm.1} parent=1 // pred_check
      _
    $region27: #{belief_lstm.1} parent=1 // pred_check_branch
      %290 = sbr.rel (0) target = $region29
    $region28: #{belief_lstm.1} parent=1 // pred_region
      _
    $region29: #{belief_lstm.1} parent=1 // pred_fallthru
      _
    %291 = vsyncpa [#allocation3], 1

</llo_original>
